<compile_context>
chip_gen: v7x
topology: tpu7x:2x2x1
jax: 0.10.0
libtpu: 0.0.40
codegen_flags: <defaults>
</compile_context>

<pallas_src>
import functools

import jax
import jax.numpy as jnp
from jax.experimental import pallas as pl
from jax.experimental.pallas import tpu as pltpu


def _round_up(x, m):
    return ((x + m - 1) // m) * m


def _critic_kernel(sa_ref, w1_ref, b1_ref, w2_ref, b2_ref, w3_ref, b3_ref,
                   q_ref):
    """One batch tile of the 3-layer MLP.

    sa_ref : (TB, S+A)  packed [state | action] tile (bf16 or f32)
    w1     : (S+A, H1)              b1: (1, H1)  f32
    w2     : (H1,  H2)              b2: (1, H2)  f32
    w3     : (1,   H2)  row layout  b3: (1, 1)   f32
    q_ref  : (1, 1, TB) lane-dense Q row for this tile (f32)
    """
    # Layer 1: single fused MXU matmul over the packed tile, f32 accumulation.
    h1 = jnp.dot(sa_ref[...], w1_ref[...], preferred_element_type=jnp.float32)
    h1 = jnp.maximum(h1 + b1_ref[...], 0.0)              # bias + ReLU in f32

    # Layer 2: MXU matmul (bf16 operands when enabled), f32 accumulation.
    h1 = h1.astype(w2_ref.dtype)
    h2 = jnp.dot(h1, w2_ref[...], preferred_element_type=jnp.float32)
    h2 = jnp.maximum(h2 + b2_ref[...], 0.0)              # bias + ReLU in f32

    # Layer 3 (H2 -> 1): VPU multiply + lane reduce (skips the MXU).  The
    # (TB,) result broadcasts against the (1, 1) bias into a lane-dense
    # (1, TB) row which is stored unmasked.
    q = jnp.sum(h2 * w3_ref[...], axis=-1) + b3_ref[...]
    q_ref[...] = q.reshape(q_ref.shape).astype(q_ref.dtype)


@functools.partial(jax.jit, static_argnames=("use_bf16", "tile_rows"))
def critic_forward_pallas(state, action, params, *, use_bf16=True,
                          tile_rows=2048):
    """Pallas forward. Handles 2D (B, F) or 3D (T, B, F) inputs."""
    w1, b1, w2, b2, w3, b3 = params

    lead = None
    if state.ndim == 3:
        lead = state.shape[:2]
        state = state.reshape(-1, state.shape[-1])
        action = action.reshape(-1, action.shape[-1])

    rows = state.shape[0]
    S = state.shape[-1]
    A = action.shape[-1]
    F = S + A
    H1 = w1.shape[1]
    H2 = w2.shape[1]

    in_dtype = jnp.bfloat16 if use_bf16 else jnp.float32

    # Pack [state | action] once (cat + cast fuse under jit) so layer 1 is a
    # single K=S+A matmul instead of two tiny-K MXU passes.
    sa = jnp.concatenate([state, action], axis=-1).astype(in_dtype)
    w1c = w1.astype(in_dtype)
    w2c = w2.astype(in_dtype)
    w3_row = w3.reshape(1, H2)      # (H2, 1) -> (1, H2) row for the VPU reduce

    # Batch tiling. Single tile: use the full (possibly unaligned) extent.
    # Multi-tile: 8-aligned tiles; the ragged last tile is handled by Pallas'
    # clamped DMAs (no wrapper jnp.pad) and sliced off below.
    if rows <= tile_rows:
        TB = rows
    else:
        TB = _round_up(tile_rows, 8)
    ntiles = pl.cdiv(rows, TB)

    tile_in = pl.BlockSpec((TB, F), lambda i: (i, 0))

    def resident(shape):
        return pl.BlockSpec(shape, lambda i: (0,) * len(shape))

    q_tiles = pl.pallas_call(
        _critic_kernel,
        out_shape=jax.ShapeDtypeStruct((ntiles, 1, TB), jnp.float32),
        grid=(ntiles,),
        in_specs=[
            tile_in,                   # packed [state|action] tile
            resident((F, H1)),         # w1 (VMEM-resident across grid steps)
            resident((1, H1)),         # b1
            resident((H1, H2)),        # w2
            resident((1, H2)),         # b2
            resident((1, H2)),         # w3 row
            resident((1, 1)),          # b3
        ],
        out_specs=pl.BlockSpec((1, 1, TB), lambda i: (i, 0, 0)),
        compiler_params=pltpu.CompilerParams(
            dimension_semantics=("parallel",)),
    )(sa, w1c, b1, w2c, b2, w3_row, b3)

    q2d = q_tiles.reshape(ntiles * TB)[:rows][:, None]
    if lead is not None:
        return q2d.reshape(lead + (1,))
    return q2d


def critic_forward(state, action, params, *, pallas_min_batch=1024,
                   use_bf16=True):
    """Dispatcher: tiny batches go to XLA's fused path, big ones to Pallas."""
    rows = state.shape[0] if state.ndim == 2 else state.shape[0] * state.shape[1]
    if rows < pallas_min_batch:
        return _reference_forward(state, action, params)
    return critic_forward_pallas(state, action, params, use_bf16=use_bf16)


def init_critic_params(key, state_dim, action_dim, hidden_sizes=(128, 128)):
    """PyTorch-style uniform(-1/sqrt(fan_in), 1/sqrt(fan_in)) init.

    Weights are returned in (in_features, out_features) layout.
    """
    dims = [(state_dim + action_dim, hidden_sizes[0]),
            (hidden_sizes[0], hidden_sizes[1]),
            (hidden_sizes[1], 1)]
    params = []
    for (fan_in, fan_out) in dims:
        key, kw, kb = jax.random.split(key, 3)
        bound = 1.0 / jnp.sqrt(jnp.float32(fan_in))
        w = jax.random.uniform(kw, (fan_in, fan_out), jnp.float32,
                               minval=-bound, maxval=bound)
        b = jax.random.uniform(kb, (1, fan_out), jnp.float32,
                               minval=-bound, maxval=bound)
        params += [w, b]
    return tuple(params)


@jax.jit
def _reference_forward(state, action, params):
    """Pure-JAX reference (mirrors the PyTorch forward, f32)."""
    w1, b1, w2, b2, w3, b3 = params
    axis = 2 if state.ndim == 3 else 1
    sa = jnp.concatenate([state, action], axis=axis)
    q = jax.nn.relu(sa @ w1 + b1[0])
    q = jax.nn.relu(q @ w2 + b2[0])
    return q @ w3 + b3[0]


if __name__ == "__main__":
    key = jax.random.PRNGKey(0)
    keys = jax.random.split(key, 11)

    state_dim = 8
    action_dim = 4
    hidden_sizes = (128, 128)   # matches the PyTorch module's default
    params = init_critic_params(keys[0], state_dim, action_dim, hidden_sizes)

    def check(state, action, *, use_bf16, tile_rows=2048, atol, rtol):
        q = jax.block_until_ready(
            critic_forward_pallas(state, action, params,
                                  use_bf16=use_bf16, tile_rows=tile_rows))
        q_ref = _reference_forward(state, action, params)
        assert q.shape == q_ref.shape, (q.shape, q_ref.shape)
        assert jnp.allclose(q, q_ref, atol=atol, rtol=rtol), \
            float(jnp.max(jnp.abs(q - q_ref)))
        return q

    # --- small 2D batch, single tile: exact-f32 path and bf16 path ---
    s = jax.random.normal(keys[1], (8, state_dim), jnp.float32)
    a = jax.random.normal(keys[2], (8, action_dim), jnp.float32)
    check(s, a, use_bf16=False, atol=1e-3, rtol=1e-3)
    check(s, a, use_bf16=True, atol=5e-2, rtol=5e-2)

    # --- multi-tile grid with a ragged last tile (no wrapper padding) ---
    s = jax.random.normal(keys[3], (300, state_dim), jnp.float32)
    a = jax.random.normal(keys[4], (300, action_dim), jnp.float32)
    check(s, a, use_bf16=False, tile_rows=128, atol=1e-3, rtol=1e-3)
    check(s, a, use_bf16=True, tile_rows=128, atol=5e-2, rtol=5e-2)

    # --- rows not a multiple of 8 across several tiles ---
    s = jax.random.normal(keys[5], (45, state_dim), jnp.float32)
    a = jax.random.normal(keys[6], (45, action_dim), jnp.float32)
    check(s, a, use_bf16=True, tile_rows=16, atol=5e-2, rtol=5e-2)

    # --- 3D (T, B, F) input, cat along dim=2 semantics ---
    s = jax.random.normal(keys[7], (2, 5, state_dim), jnp.float32)
    a = jax.random.normal(keys[8], (2, 5, action_dim), jnp.float32)
    q = check(s, a, use_bf16=False, atol=1e-3, rtol=1e-3)
    assert q.shape == (2, 5, 1), q.shape

    # --- default config (TB=2048): two grid tiles + ragged tail ---
    s = jax.random.normal(keys[9], (2500, state_dim), jnp.float32)
    a = jax.random.normal(keys[10], (2500, action_dim), jnp.float32)
    check(s, a, use_bf16=True, atol=5e-2, rtol=5e-2)

    # --- dispatcher paths (tiny -> XLA, large -> Pallas) ---
    q_small = jax.block_until_ready(critic_forward(s[:16], a[:16], params))
    assert q_small.shape == (16, 1), q_small.shape
    q_big = jax.block_until_ready(critic_forward(s, a, params))
    assert q_big.shape == (2500, 1), q_big.shape

    print("KERNEL_OK")
</pallas_src>

<mosaic_0001>
module attributes {stable_mosaic.version = 11 : i64} {
  func.func @_critic_kernel(%arg0: i32, %arg1: memref<8x12xf32, #tpu.memory_space<vmem>>, %arg2: memref<12x128xf32, #tpu.memory_space<vmem>>, %arg3: memref<1x128xf32, #tpu.memory_space<vmem>>, %arg4: memref<128x128xf32, #tpu.memory_space<vmem>>, %arg5: memref<1x128xf32, #tpu.memory_space<vmem>>, %arg6: memref<1x128xf32, #tpu.memory_space<vmem>>, %arg7: memref<1x1xf32, #tpu.memory_space<vmem>>, %arg8: memref<1x1x8xf32, #tpu.memory_space<vmem>>) attributes {dimension_semantics = [#tpu.dimension_semantics<parallel>], iteration_bounds = array<i64: 1>, scalar_prefetch = 0 : i64, scratch_operands = 0 : i64, tpu.core_type = #tpu.core_type<tc>, window_params = [{transform_indices = @transform_0, window_bounds = array<i64: 8, 12>}, {pipeline_mode = #tpu.pipeline_mode<synchronous>, transform_indices = @transform_1, window_bounds = array<i64: 12, 128>}, {pipeline_mode = #tpu.pipeline_mode<synchronous>, transform_indices = @transform_2, window_bounds = array<i64: 1, 128>}, {pipeline_mode = #tpu.pipeline_mode<synchronous>, transform_indices = @transform_3, window_bounds = array<i64: 128, 128>}, {pipeline_mode = #tpu.pipeline_mode<synchronous>, transform_indices = @transform_4, window_bounds = array<i64: 1, 128>}, {pipeline_mode = #tpu.pipeline_mode<synchronous>, transform_indices = @transform_5, window_bounds = array<i64: 1, 128>}, {pipeline_mode = #tpu.pipeline_mode<synchronous>, transform_indices = @transform_6, window_bounds = array<i64: 1, 1>}, {transform_indices = @transform_7, window_bounds = array<i64: 1, 1, 8>}]} {
    %c0 = arith.constant 0 : index
    %c0_0 = arith.constant 0 : index
    %0 = vector.load %arg1[%c0, %c0_0] : memref<8x12xf32, #tpu.memory_space<vmem>>, vector<8x12xf32>
    %c0_1 = arith.constant 0 : index
    %c0_2 = arith.constant 0 : index
    %1 = vector.load %arg2[%c0_1, %c0_2] : memref<12x128xf32, #tpu.memory_space<vmem>>, vector<12x128xf32>
    %cst = arith.constant dense<0.000000e+00> : vector<8x128xf32>
    %2 = tpu.matmul %0, %1, %cst {dimension_numbers = #tpu.dot_dimension_numbers<[1], [0], [0], [1], [0, 0, 1, 1], [], []>} : vector<8x12xf32>, vector<12x128xf32>, vector<8x128xf32> -> vector<8x128xf32>
    %c0_3 = arith.constant 0 : index
    %c0_4 = arith.constant 0 : index
    %3 = vector.load %arg3[%c0_3, %c0_4] : memref<1x128xf32, #tpu.memory_space<vmem>>, vector<1x128xf32>
    %4 = vector.broadcast %3 : vector<1x128xf32> to vector<8x128xf32>
    %5 = arith.addf %2, %4 : vector<8x128xf32>
    %cst_5 = arith.constant 0.000000e+00 : f32
    %6 = vector.broadcast %cst_5 : f32 to vector<8x128xf32>
    %7 = arith.maximumf %5, %6 : vector<8x128xf32>
    %c0_6 = arith.constant 0 : index
    %c0_7 = arith.constant 0 : index
    %8 = vector.load %arg4[%c0_6, %c0_7] : memref<128x128xf32, #tpu.memory_space<vmem>>, vector<128x128xf32>
    %cst_8 = arith.constant dense<0.000000e+00> : vector<8x128xf32>
    %9 = tpu.matmul %7, %8, %cst_8 {dimension_numbers = #tpu.dot_dimension_numbers<[1], [0], [0], [1], [0, 0, 1, 1], [], []>} : vector<8x128xf32>, vector<128x128xf32>, vector<8x128xf32> -> vector<8x128xf32>
    %c0_9 = arith.constant 0 : index
    %c0_10 = arith.constant 0 : index
    %10 = vector.load %arg5[%c0_9, %c0_10] : memref<1x128xf32, #tpu.memory_space<vmem>>, vector<1x128xf32>
    %11 = vector.broadcast %10 : vector<1x128xf32> to vector<8x128xf32>
    %12 = arith.addf %9, %11 : vector<8x128xf32>
    %cst_11 = arith.constant 0.000000e+00 : f32
    %13 = vector.broadcast %cst_11 : f32 to vector<8x128xf32>
    %14 = arith.maximumf %12, %13 : vector<8x128xf32>
    %c0_12 = arith.constant 0 : index
    %c0_13 = arith.constant 0 : index
    %15 = vector.load %arg6[%c0_12, %c0_13] : memref<1x128xf32, #tpu.memory_space<vmem>>, vector<1x128xf32>
    %16 = vector.broadcast %15 : vector<1x128xf32> to vector<8x128xf32>
    %17 = arith.mulf %14, %16 : vector<8x128xf32>
    %cst_14 = arith.constant dense<0.000000e+00> : vector<8xf32>
    %18 = vector.multi_reduction <add>, %17, %cst_14 [1] : vector<8x128xf32> to vector<8xf32>
    %c0_15 = arith.constant 0 : index
    %c0_16 = arith.constant 0 : index
    %19 = vector.load %arg7[%c0_15, %c0_16] : memref<1x1xf32, #tpu.memory_space<vmem>>, vector<1x1xf32>
    %20 = vector.shape_cast %18 : vector<8xf32> to vector<1x8xf32>
    %21 = vector.broadcast %19 : vector<1x1xf32> to vector<1x8xf32>
    %22 = arith.addf %20, %21 : vector<1x8xf32>
    %23 = vector.shape_cast %22 : vector<1x8xf32> to vector<1x1x8xf32>
    %c0_17 = arith.constant 0 : index
    %c0_18 = arith.constant 0 : index
    %c0_19 = arith.constant 0 : index
    %24 = vector.load %arg8[%c0_17, %c0_18, %c0_19] : memref<1x1x8xf32, #tpu.memory_space<vmem>>, vector<1x1x8xf32>
    tpu.vector_store %arg8[%c0_17, %c0_18, %c0_19], %23 {strides = array<i32>} : memref<1x1x8xf32, #tpu.memory_space<vmem>>, vector<1x1x8xf32>,
    return
  }
  func.func @transform_0(%arg0: i32) -> (i32, i32) {
    %c0_i32 = arith.constant 0 : i32
    %c0_i32_0 = arith.constant 0 : i32
    return %arg0, %c0_i32 : i32, i32
  }
  func.func @transform_1(%arg0: i32) -> (i32, i32) {
    %c0_i32 = arith.constant 0 : i32
    %c0_i32_0 = arith.constant 0 : i32
    %c0_i32_1 = arith.constant 0 : i32
    return %c0_i32, %c0_i32_0 : i32, i32
  }
  func.func @transform_2(%arg0: i32) -> (i32, i32) {
    %c0_i32 = arith.constant 0 : i32
    %c0_i32_0 = arith.constant 0 : i32
    %c0_i32_1 = arith.constant 0 : i32
    return %c0_i32, %c0_i32_0 : i32, i32
  }
  func.func @transform_3(%arg0: i32) -> (i32, i32) {
    %c0_i32 = arith.constant 0 : i32
    %c0_i32_0 = arith.constant 0 : i32
    %c0_i32_1 = arith.constant 0 : i32
    return %c0_i32, %c0_i32_0 : i32, i32
  }
  func.func @transform_4(%arg0: i32) -> (i32, i32) {
    %c0_i32 = arith.constant 0 : i32
    %c0_i32_0 = arith.constant 0 : i32
    %c0_i32_1 = arith.constant 0 : i32
    return %c0_i32, %c0_i32_0 : i32, i32
  }
  func.func @transform_5(%arg0: i32) -> (i32, i32) {
    %c0_i32 = arith.constant 0 : i32
    %c0_i32_0 = arith.constant 0 : i32
    %c0_i32_1 = arith.constant 0 : i32
    return %c0_i32, %c0_i32_0 : i32, i32
  }
  func.func @transform_6(%arg0: i32) -> (i32, i32) {
    %c0_i32 = arith.constant 0 : i32
    %c0_i32_0 = arith.constant 0 : i32
    %c0_i32_1 = arith.constant 0 : i32
    return %c0_i32, %c0_i32_0 : i32, i32
  }
  func.func @transform_7(%arg0: i32) -> (i32, i32, i32) {
    %c0_i32 = arith.constant 0 : i32
    %c0_i32_0 = arith.constant 0 : i32
    %c0_i32_1 = arith.constant 0 : i32
    return %arg0, %c0_i32, %c0_i32_0 : i32, i32, i32
  }
}

</mosaic_0001>

<llo_original>
// kernel: critic_forward_pallas.1
$region0: #{critic_forward_pallas.1}
  #allocation0 [shape = 'u32[]', space=smem, size = 0x4, offset = 0x4, fixed_abs, tag = 'smem constant byte address 0x4 - core index']
  #allocation1 [shape = 'u32[144,128]{1,0:T(1,128)}', space=vmem, size = 0x12000, scoped, tag = 'internal scratch']
  #allocation2 [shape = 'f32[1,1]{1,0:T(1,128)S(1)}', space=vmem, size = 0x200, scoped, tag = 'scoped memory for critic_forward_pallas.1']
  %s0 = inlined_call_operand.vmem [shape: f32[8,12], index: 0, kind: input, shape index: {}]
  %s1 = inlined_call_operand.vmem [shape: f32[12,128], index: 1, kind: input, shape index: {}]
  %s2 = inlined_call_operand.vmem [shape: f32[1,128], index: 2, kind: input, shape index: {}]
  %s3 = inlined_call_operand.hbm [shape: f32[128,128], index: 3, kind: input, shape index: {}]
  %s4 = inlined_call_operand.vmem [shape: f32[1,128], index: 4, kind: input, shape index: {}]
  %s5 = inlined_call_operand.vmem [shape: f32[1,128], index: 5, kind: input, shape index: {}]
  %s6 = inlined_call_operand.<no memory space> [shape: f32[1,1], index: 6, kind: input, shape index: {}]
  %s7 = inlined_call_operand.hbm [shape: f32[1,1,8], index: 7, kind: output, shape index: {}]
  %s8 = sld [smem:[#allocation0]]
  $region42: #{critic_forward_pallas.1} parent=0
    _
  %s10 = ssub.s32 1, %s8
  %s11 = scalar_select 0, %s10, %s8
  %v12 = vstv %s6
  %13 = vst [vmem:[#allocation2] sm:$0x1] %v12
  $region1: #{critic_forward_pallas.1} parent=0
    #allocation3 [shape = 'u8[65536]{0}', space=vmem, size = 0x10000, scoped, tag = 'input window, operand 3, single buffered']
    #allocation4 [shape = 's32[1]{0}', space=sflag, size = 0x4, scoped, tag = 'scoped memory for critic_forward_pallas.1']
    #allocation5 [shape = 's32[1]{0}', space=sflag, size = 0x4, scoped, tag = 'scoped memory for critic_forward_pallas.1']
    #allocation6 [shape = 'u8[512]{0}', space=vmem, size = 0x400, scoped, tag = 'output window, operand 0, single buffered']
    %14 = vsyncpa [#allocation4], 0
    %15 = vsyncpa [#allocation5], 0
    // Predicated region
    $region2: #{critic_forward_pallas.1} parent=1 // pred_check
      _
    $region3: #{critic_forward_pallas.1} parent=1 // pred_check_branch
      %17 = sbr.rel (0) target = $region5
    $region4: #{critic_forward_pallas.1} parent=1 // pred_region
      _
    $region5: #{critic_forward_pallas.1} parent=1 // pred_fallthru
      _
    // Predicated region
    $region6: #{critic_forward_pallas.1} parent=1 // pred_check
      _
    $region7: #{critic_forward_pallas.1} parent=1 // pred_check_branch
      %19 = sbr.rel (0) target = $region9
    $region8: #{critic_forward_pallas.1} parent=1 // pred_region
      _
    $region9: #{critic_forward_pallas.1} parent=1 // pred_fallthru
      _
    // Predicated region
    $region10: #{critic_forward_pallas.1} parent=1 // pred_check
      _
    $region11: #{critic_forward_pallas.1} parent=1 // pred_check_branch
      %21 = sbr.rel (0) target = $region13
    $region12: #{critic_forward_pallas.1} parent=1 // pred_region
      _
    $region13: #{critic_forward_pallas.1} parent=1 // pred_fallthru
      _
    // Predicated region
    $region14: #{critic_forward_pallas.1} parent=1 // pred_check
      _
    $region15: #{critic_forward_pallas.1} parent=1 // pred_check_branch
      %23 = sbr.rel (0) target = $region17
    $region16: #{critic_forward_pallas.1} parent=1 // pred_region
      %s25 = ssub.s32 2048, 2048
      %26 = vsyncadd [#allocation4], %s25
      %s27 = sshll.u32 [#allocation3], 4
      %s28 = int_to_ptr.vmem [resolvable:$true] %s27
      %33 = dma.hbm_to_vmem [thread:$0]  %s3, 2048, %s28, [#allocation4], 128, 128, 8
    $region17: #{critic_forward_pallas.1} parent=1 // pred_fallthru
      _
    // Predicated region
    $region18: #{critic_forward_pallas.1} parent=1 // pred_check
      _
    $region19: #{critic_forward_pallas.1} parent=1 // pred_check_branch
      %35 = sbr.rel (0) target = $region21
    $region20: #{critic_forward_pallas.1} parent=1 // pred_region
      _
    $region21: #{critic_forward_pallas.1} parent=1 // pred_fallthru
      _
    // Predicated region
    $region22: #{critic_forward_pallas.1} parent=1 // pred_check
      _
    $region23: #{critic_forward_pallas.1} parent=1 // pred_check_branch
      %37 = sbr.rel (0) target = $region25
    $region24: #{critic_forward_pallas.1} parent=1 // pred_region
      _
    $region25: #{critic_forward_pallas.1} parent=1 // pred_fallthru
      _
    // Predicated region
    $region26: #{critic_forward_pallas.1} parent=1 // pred_check
      _
    $region27: #{critic_forward_pallas.1} parent=1 // pred_check_branch
      %39 = sbr.rel (0) target = $region29
    $region28: #{critic_forward_pallas.1} parent=1 // pred_region
      _
    $region29: #{critic_forward_pallas.1} parent=1 // pred_fallthru
      _
    // Predicated region
    $region30: #{critic_forward_pallas.1} parent=1 // pred_check
      _
    $region31: #{critic_forward_pallas.1} parent=1 // pred_check_branch
      %41 = sbr.rel (0) target = $region33
    $region32: #{critic_forward_pallas.1} parent=1 // pred_region
      %42 = dma.done [#allocation4], 2048
    $region33: #{critic_forward_pallas.1} parent=1 // pred_fallthru
      _
    %v43 = vld [vmem:[%s0] sm:$0xff]
    %v44 = vld [vmem:[%s1] sm:$0xff]
    %v45 = vld [vmem:[%s1 + $0x8] sm:$0xf]
    %v46 = vld [vmem:[%s2] sm:$0x1]
    %v48 = vlaneseq
    %v49 = vshrl.u32 %v48, 7
    %v50 = vsub.s32 0, %v49
    %v51 = vrot.slane %v46, %v50
    %vm53 = vcmask 97280
    %v55 = vsel %vm53, %v43, 0
    %vm57 = vcmask 1043456
    %v59 = vsel %vm57, %v45, 0
    %61 = vmatprep.subr.mxu0 0.0
    %62 = vmatpush1.msra.mxu0 %v44
    %63 = vmatprep.subr.mxu0 0.0
    %64 = vmatpush1.msra.mxu0 %v59
    %65 = vmatprep.subr.mxu0 0.0
    %66 = vmatpush1.msra.mxu0 0.0
    %67 = vmatprep.subr.mxu0 0.0
    %68 = vmatpush1.msra.mxu0 0.0
    %69 = vmatprep.subr.mxu0 0.0
    %70 = vmatpush1.msra.mxu0 0.0
    %71 = vmatprep.subr.mxu0 0.0
    %72 = vmatpush1.msra.mxu0 0.0
    %73 = vmatprep.subr.mxu0 0.0
    %74 = vmatpush1.msra.mxu0 0.0
    %75 = vmatprep.subr.mxu0 0.0
    %76 = vmatpush1.msra.mxu0 0.0
    %77 = vmatprep.subr.mxu0 0.0
    %78 = vmatpush1.msra.mxu0 0.0
    %79 = vmatprep.subr.mxu0 0.0
    %80 = vmatpush1.msra.mxu0 0.0
    %81 = vmatprep.subr.mxu0 0.0
    %82 = vmatpush1.msra.mxu0 0.0
    %83 = vmatprep.subr.mxu0 0.0
    %84 = vmatpush1.msra.mxu0 0.0
    %85 = vmatprep.subr.mxu0 0.0
    %86 = vmatpush1.msra.mxu0 0.0
    %87 = vmatprep.subr.mxu0 0.0
    %88 = vmatpush1.msra.mxu0 0.0
    %89 = vmatprep.subr.mxu0 0.0
    %90 = vmatpush1.msra.mxu0 0.0
    %91 = vmatprep.subr.mxu0 0.0
    %92 = vmatpush1.msra.mxu0 0.0
    %93 = vmatprep.subr.mxu0 0.0
    %94 = vmatpush1.msra.mxu0 0.0
    %95 = vmatprep.subr.mxu0 0.0
    %96 = vmatpush1.msra.mxu0 0.0
    %97 = vmatprep.subr.mxu0 0.0
    %98 = vmatpush1.msra.mxu0 0.0
    %99 = vmatprep.subr.mxu0 0.0
    %100 = vmatpush1.msra.mxu0 0.0
    %101 = vmatprep.subr.mxu0 0.0
    %102 = vmatpush1.msra.mxu0 0.0
    %103 = vmatprep.subr.mxu0 0.0
    %104 = vmatpush1.msra.mxu0 0.0
    %105 = vmatprep.subr.mxu0 0.0
    %106 = vmatpush1.msra.mxu0 0.0
    %107 = vmatprep.subr.mxu0 0.0
    %108 = vmatpush1.msra.mxu0 0.0
    %109 = vmatprep.subr.mxu0 0.0
    %110 = vmatpush1.msra.mxu0 0.0
    %111 = vmatprep.subr.mxu0 0.0
    %112 = vmatpush1.msra.mxu0 0.0
    %113 = vmatprep.subr.mxu0 0.0
    %114 = vmatpush1.msra.mxu0 0.0
    %115 = vmatprep.subr.mxu0 0.0
    %116 = vmatpush1.msra.mxu0 0.0
    %117 = vmatprep.subr.mxu0 0.0
    %118 = vmatpush1.msra.mxu0 0.0
    %119 = vmatprep.subr.mxu0 0.0
    %120 = vmatpush1.msra.mxu0 0.0
    %121 = vmatprep.subr.mxu0 0.0
    %122 = vmatpush1.msra.mxu0 0.0
    %123 = vmatprep.subr.mxu0 0.0
    %124 = vmatpush1.msra.mxu0 0.0
    %125 = vmatprep.mubr.f32.mxu0 0.0
    %126 = vmatmul.mubr.f32.gmra.mrb[0].mxu0 %v55
    %v127 = vpop.f32.mrb[0].mxu0
    %v128 = vadd.f32 %v51, %v127
    %v129 = vpop.f32.mrb[0].mxu0
    %130 = vdwg.mxu0
    %v131 = vmax.f32 %v128, 0.0
    %v132 = vld [vmem:[#allocation3] sm:$0xff]
    %v133 = vld [vmem:[#allocation3 + $0x8] sm:$0xff]
    %v134 = vld [vmem:[#allocation3 + $0x10] sm:$0xff]
    %v135 = vld [vmem:[#allocation3 + $0x18] sm:$0xff]
    %v136 = vld [vmem:[#allocation3 + $0x20] sm:$0xff]
    %v137 = vld [vmem:[#allocation3 + $0x28] sm:$0xff]
    %v138 = vld [vmem:[#allocation3 + $0x30] sm:$0xff]
    %v139 = vld [vmem:[#allocation3 + $0x38] sm:$0xff]
    %v140 = vld [vmem:[#allocation3 + $0x40] sm:$0xff]
    %v141 = vld [vmem:[#allocation3 + $0x48] sm:$0xff]
    %v142 = vld [vmem:[#allocation3 + $0x50] sm:$0xff]
    %v143 = vld [vmem:[#allocation3 + $0x58] sm:$0xff]
    %v144 = vld [vmem:[#allocation3 + $0x60] sm:$0xff]
    %v145 = vld [vmem:[#allocation3 + $0x68] sm:$0xff]
    %v146 = vld [vmem:[#allocation3 + $0x70] sm:$0xff]
    %v147 = vld [vmem:[#allocation3 + $0x78] sm:$0xff]
    %v148 = vld [vmem:[%s4] sm:$0x1]
    %v150 = vlaneseq
    %v151 = vshrl.u32 %v150, 7
    %v152 = vsub.s32 0, %v151
    %v153 = vrot.slane %v148, %v152
    %155 = vmatprep.subr.mxu0 0.0
    %156 = vmatpush1.msra.mxu0 %v132
    %157 = vmatprep.subr.mxu0 0.0
    %158 = vmatpush1.msra.mxu0 %v133
    %159 = vmatprep.subr.mxu0 0.0
    %160 = vmatpush1.msra.mxu0 %v134
    %161 = vmatprep.subr.mxu0 0.0
    %162 = vmatpush1.msra.mxu0 %v135
    %163 = vmatprep.subr.mxu0 0.0
    %164 = vmatpush1.msra.mxu0 %v136
    %165 = vmatprep.subr.mxu0 0.0
    %166 = vmatpush1.msra.mxu0 %v137
    %167 = vmatprep.subr.mxu0 0.0
    %168 = vmatpush1.msra.mxu0 %v138
    %169 = vmatprep.subr.mxu0 0.0
    %170 = vmatpush1.msra.mxu0 %v139
    %171 = vmatprep.subr.mxu0 0.0
    %172 = vmatpush1.msra.mxu0 %v140
    %173 = vmatprep.subr.mxu0 0.0
    %174 = vmatpush1.msra.mxu0 %v141
    %175 = vmatprep.subr.mxu0 0.0
    %176 = vmatpush1.msra.mxu0 %v142
    %177 = vmatprep.subr.mxu0 0.0
    %178 = vmatpush1.msra.mxu0 %v143
    %179 = vmatprep.subr.mxu0 0.0
    %180 = vmatpush1.msra.mxu0 %v144
    %181 = vmatprep.subr.mxu0 0.0
    %182 = vmatpush1.msra.mxu0 %v145
    %183 = vmatprep.subr.mxu0 0.0
    %184 = vmatpush1.msra.mxu0 %v146
    %185 = vmatprep.subr.mxu0 0.0
    %186 = vmatpush1.msra.mxu0 %v147
    %187 = vmatprep.subr.mxu0 0.0
    %188 = vmatpush1.msra.mxu0 0.0
    %189 = vmatprep.subr.mxu0 0.0
    %190 = vmatpush1.msra.mxu0 0.0
    %191 = vmatprep.subr.mxu0 0.0
    %192 = vmatpush1.msra.mxu0 0.0
    %193 = vmatprep.subr.mxu0 0.0
    %194 = vmatpush1.msra.mxu0 0.0
    %195 = vmatprep.subr.mxu0 0.0
    %196 = vmatpush1.msra.mxu0 0.0
    %197 = vmatprep.subr.mxu0 0.0
    %198 = vmatpush1.msra.mxu0 0.0
    %199 = vmatprep.subr.mxu0 0.0
    %200 = vmatpush1.msra.mxu0 0.0
    %201 = vmatprep.subr.mxu0 0.0
    %202 = vmatpush1.msra.mxu0 0.0
    %203 = vmatprep.subr.mxu0 0.0
    %204 = vmatpush1.msra.mxu0 0.0
    %205 = vmatprep.subr.mxu0 0.0
    %206 = vmatpush1.msra.mxu0 0.0
    %207 = vmatprep.subr.mxu0 0.0
    %208 = vmatpush1.msra.mxu0 0.0
    %209 = vmatprep.subr.mxu0 0.0
    %210 = vmatpush1.msra.mxu0 0.0
    %211 = vmatprep.subr.mxu0 0.0
    %212 = vmatpush1.msra.mxu0 0.0
    %213 = vmatprep.subr.mxu0 0.0
    %214 = vmatpush1.msra.mxu0 0.0
    %215 = vmatprep.subr.mxu0 0.0
    %216 = vmatpush1.msra.mxu0 0.0
    %217 = vmatprep.subr.mxu0 0.0
    %218 = vmatpush1.msra.mxu0 0.0
    %219 = vmatprep.mubr.f32.mxu0 0.0
    %220 = vmatmul.mubr.f32.gmra.mrb[0].mxu0 %v131
    %v221 = vpop.f32.mrb[0].mxu0
    %v222 = vadd.f32 %v153, %v221
    %v223 = vpop.f32.mrb[0].mxu0
    %224 = vdwg.mxu0
    %v225 = vmax.f32 %v222, 0.0
    %v226 = vld [vmem:[%s5] sm:$0x1]
    %v228 = vlaneseq
    %v229 = vshrl.u32 %v228, 7
    %v230 = vsub.s32 0, %v229
    %v231 = vrot.slane %v226, %v230
    %v233 = vmul.f32 %v225, %v231
    %234 = vadd.xlane.f32.xlu0 %v233
    %v235 = vpop.xlane.xlu0 %234
    %v236 = vld [vmem:[#allocation2] sm:$0x1]
    %238 = vset.pattern.permute.xlu0 0
    %239 = vperm.xlu0 %238, %v236
    %v240 = vpop.permute.xlu0 %239
    %v242 = vlaneseq
    %v243 = vshrl.u32 %v242, 7
    %v244 = vsub.s32 0, %v243
    %v245 = vrot.slane %v240, %v244
    %v246 = vadd.f32 %v235, %v245
    %v248 = vlaneseq
    %v249 = vand.u32 %v248, 127
    %v250 = vlaneseq
    %v251 = vshrl.u32 %v250, 7
    %v252 = vsub.s32 %v249, %v251
    %v253 = vrot.slane %v246, %v252
    %vm255 = vcmask 57344
    %256 = vst.msk [vmem:[#allocation6] sm:$0x1] %vm255, %v253
    // Predicated region
    $region34: #{critic_forward_pallas.1} parent=1 // pred_check
      _
    $region35: #{critic_forward_pallas.1} parent=1 // pred_check_branch
      %258 = sbr.rel (0) target = $region37
    $region36: #{critic_forward_pallas.1} parent=1 // pred_region
      %s260 = ssub.s32 16, 16
      %261 = vsyncadd [#allocation5], %s260
      %s263 = sshll.u32 [#allocation6], 4
      %s264 = int_to_ptr.vmem [resolvable:$true] %s263
      %266 = dma.vmem_to_hbm [thread:$0]  %s264, 16, %s7, [#allocation5]
    $region37: #{critic_forward_pallas.1} parent=1 // pred_fallthru
      _
    // Predicated region
    $region38: #{critic_forward_pallas.1} parent=1 // pred_check
      _
    $region39: #{critic_forward_pallas.1} parent=1 // pred_check_branch
      %268 = sbr.rel (0) target = $region41
    $region40: #{critic_forward_pallas.1} parent=1 // pred_region
      %269 = dma.done [#allocation5], 16
    $region41: #{critic_forward_pallas.1} parent=1 // pred_fallthru
      _
    %270 = vsyncpa [#allocation4], 1
    %271 = vsyncpa [#allocation5], 1

</llo_original>
